<compile_context>
chip_gen: v7x
topology: tpu7x:2x2x1
jax: 0.10.0
libtpu: 0.0.40
codegen_flags: <defaults>
</compile_context>

<pallas_src>
import functools
import math

import jax
import jax.numpy as jnp
from jax import lax
from jax.experimental import pallas as pl
from jax.experimental.pallas import tpu as pltpu


def _round_up(x, m):
    return ((x + m - 1) // m) * m


def _qkv_proj_kernel(h_ref, w_ref, b_ref, q_ref, k_ref, v_ref, *, fp):
    """Fused (scaled-Q | K | V) projection for one tile of node rows."""
    bf16 = jnp.bfloat16
    qkv = jnp.dot(h_ref[...].astype(bf16), w_ref[...].astype(bf16),
                  preferred_element_type=jnp.float32) + b_ref[...]
    qkv = qkv.astype(bf16)
    # 128-aligned slices (fp is a multiple of 128) -> no relayout.
    q_ref[...] = qkv[:, :fp]
    k_ref[...] = qkv[:, fp:2 * fp]
    v_ref[...] = qkv[:, 2 * fp:]


def _attn_kernel(q_ref, k_ref, v_ref, adj_ref, o_ref):
    """Masked softmax attention for one tile of query rows (K/V resident)."""
    # scores = q @ k^T without materializing a transpose: contract the feature
    # axis of both bf16 operands directly on the MXU, accumulate in f32.
    scores = lax.dot_general(q_ref[...], k_ref[...],
                             (((1,), (1,)), ((), ())),
                             preferred_element_type=jnp.float32)

    # adjacency mask (same constant as the PyTorch module)
    scores = jnp.where(adj_ref[...] > 0, scores, -9000000000000000.0)

    # softmax over keys (f32), approx reciprocal on the EUP (free slot)
    m = jnp.max(scores, axis=-1, keepdims=True)
    e = jnp.exp(scores - m)
    l = jnp.sum(e, axis=-1, keepdims=True)
    probs = (e * pl.reciprocal(l, approx=True)).astype(jnp.bfloat16)

    # context = probs @ V
    o_ref[...] = jnp.dot(probs, v_ref[...],
                         preferred_element_type=jnp.float32).astype(o_ref.dtype)


def graph_attention_layer(h, adj, wq, bq, wk, bk, wv, bv, *, tq_target=256):
    """Forward pass of GraphAttentionLayer.

    h:   [N, F_in] float32
    adj: [N, N] (any dtype; only `> 0` matters)
    wq/wk/wv: [F_out, F_in] (PyTorch nn.Linear layout), bq/bk/bv: [F_out]
    Returns [N, F_out] float32.
    """
    n, f_in = h.shape
    f_out = wq.shape[0]
    fp = _round_up(f_out, 128)          # lane-dense feature width
    scale = 1.0 / math.sqrt(f_out)

    # Host-side prep: transpose to [F_in, F_out], fold the 1/sqrt(F_out) scale
    # into the Q projection, zero-pad features to fp, fuse Q|K|V weights,
    # compress adj to int8.
    def pad_w(w, s=1.0):
        wt = (w.T * s).astype(jnp.float32)                  # [F_in, F_out]
        return jnp.pad(wt, ((0, 0), (0, fp - f_out)))       # [F_in, fp]

    def pad_b(b, s=1.0):
        return jnp.pad((b * s).astype(jnp.float32), (0, fp - f_out))

    w_qkv = jnp.concatenate([pad_w(wq, scale), pad_w(wk), pad_w(wv)], axis=1)  # [F_in, 3fp]
    b_qkv = jnp.concatenate([pad_b(bq, scale), pad_b(bk), pad_b(bv)]).reshape(1, 3 * fp)
    adj_i8 = (adj > 0).astype(jnp.int8)
    h = h.astype(jnp.float32)

    # Query-row tiling (pad N up to a multiple of the tile; padded key columns
    # are adj==0 -> masked out, padded query rows are sliced off at the end).
    tq = tq_target if n >= tq_target else _round_up(n, 8)
    n_pad = _round_up(n, tq)
    if n_pad != n:
        h = jnp.pad(h, ((0, n_pad - n), (0, 0)))
        adj_i8 = jnp.pad(adj_i8, ((0, n_pad - n), (0, n_pad - n)))

    grid = (n_pad // tq,)

    # ---- Pass 1: fused QKV projection (computed once, stored bf16) ----------
    q, k, v = pl.pallas_call(
        functools.partial(_qkv_proj_kernel, fp=fp),
        out_shape=(
            jax.ShapeDtypeStruct((n_pad, fp), jnp.bfloat16),
            jax.ShapeDtypeStruct((n_pad, fp), jnp.bfloat16),
            jax.ShapeDtypeStruct((n_pad, fp), jnp.bfloat16),
        ),
        grid=grid,
        in_specs=[
            pl.BlockSpec((tq, f_in), lambda i: (i, 0)),       # h row tile
            pl.BlockSpec((f_in, 3 * fp), lambda i: (0, 0)),   # fused W (resident)
            pl.BlockSpec((1, 3 * fp), lambda i: (0, 0)),      # fused bias
        ],
        out_specs=(
            pl.BlockSpec((tq, fp), lambda i: (i, 0)),
            pl.BlockSpec((tq, fp), lambda i: (i, 0)),
            pl.BlockSpec((tq, fp), lambda i: (i, 0)),
        ),
        compiler_params=pltpu.CompilerParams(
            dimension_semantics=("parallel",),
        ),
    )(h, w_qkv, b_qkv)

    # ---- Pass 2: masked attention, q-row tiled, K/V resident in VMEM --------
    out = pl.pallas_call(
        _attn_kernel,
        out_shape=jax.ShapeDtypeStruct((n_pad, fp), jnp.float32),
        grid=grid,
        in_specs=[
            pl.BlockSpec((tq, fp), lambda i: (i, 0)),         # Q row tile (bf16)
            pl.BlockSpec((n_pad, fp), lambda i: (0, 0)),      # K (resident, bf16)
            pl.BlockSpec((n_pad, fp), lambda i: (0, 0)),      # V (resident, bf16)
            pl.BlockSpec((tq, n_pad), lambda i: (i, 0)),      # adj rows, int8 stream
        ],
        out_specs=pl.BlockSpec((tq, fp), lambda i: (i, 0)),
        compiler_params=pltpu.CompilerParams(
            dimension_semantics=("parallel",),
        ),
    )(q, k, v, adj_i8)

    return out[:n, :f_out]


def _torch_linear_init(key, in_features, out_features):
    """Deterministic stand-in for nn.Linear default init (uniform +/- 1/sqrt(fan_in))."""
    kw, kb = jax.random.split(key)
    bound = 1.0 / math.sqrt(in_features)
    w = jax.random.uniform(kw, (out_features, in_features), jnp.float32, -bound, bound)
    b = jax.random.uniform(kb, (out_features,), jnp.float32, -bound, bound)
    return w, b


def _reference(h, adj, wq, bq, wk, bk, wv, bv):
    q = h @ wq.T + bq
    k = h @ wk.T + bk
    v = h @ wv.T + bv
    s = (q @ k.T) / math.sqrt(wq.shape[0])
    s = jnp.where(adj > 0, s, -9000000000000000.0)
    p = jax.nn.softmax(s, axis=-1)
    return p @ v


if __name__ == "__main__":
    in_features = 16
    out_features = 32
    n_nodes = 8

    key = jax.random.PRNGKey(0)
    kh, kadj, k1, k2, k3 = jax.random.split(key, 5)

    # inputs
    h = jax.random.normal(kh, (n_nodes, in_features), jnp.float32)
    adj = (jax.random.uniform(kadj, (n_nodes, n_nodes)) > 0.5).astype(jnp.float32)
    adj = jnp.maximum(adj, jnp.eye(n_nodes, dtype=jnp.float32))  # self loops -> no empty rows

    # parameters in PyTorch layout: W [out, in], b [out]
    wq, bq = _torch_linear_init(k1, in_features, out_features)
    wk, bk = _torch_linear_init(k2, in_features, out_features)
    wv, bv = _torch_linear_init(k3, in_features, out_features)

    out = graph_attention_layer(h, adj, wq, bq, wk, bk, wv, bv)
    out = jax.block_until_ready(out)

    ref = _reference(h, adj, wq, bq, wk, bk, wv, bv)
    assert out.shape == (n_nodes, out_features)
    # bf16 MXU operands (f32 accumulation) -> slightly looser tolerance than pure f32
    assert jnp.allclose(out, ref, atol=2e-2, rtol=2e-2), "mismatch vs reference"

    print("KERNEL_OK")
</pallas_src>

<mosaic_0001>
module attributes {stable_mosaic.version = 11 : i64} {
  func.func @_qkv_proj_kernel(%arg0: i32, %arg1: memref<8x16xf32, #tpu.memory_space<vmem>>, %arg2: memref<16x384xf32, #tpu.memory_space<vmem>>, %arg3: memref<1x384xf32, #tpu.memory_space<vmem>>, %arg4: memref<8x128xbf16, #tpu.memory_space<vmem>>, %arg5: memref<8x128xbf16, #tpu.memory_space<vmem>>, %arg6: memref<8x128xbf16, #tpu.memory_space<vmem>>) attributes {dimension_semantics = [#tpu.dimension_semantics<parallel>], iteration_bounds = array<i64: 1>, scalar_prefetch = 0 : i64, scratch_operands = 0 : i64, tpu.core_type = #tpu.core_type<tc>, window_params = [{transform_indices = @transform_0, window_bounds = array<i64: 8, 16>}, {pipeline_mode = #tpu.pipeline_mode<synchronous>, transform_indices = @transform_1, window_bounds = array<i64: 16, 384>}, {pipeline_mode = #tpu.pipeline_mode<synchronous>, transform_indices = @transform_2, window_bounds = array<i64: 1, 384>}, {transform_indices = @transform_3, window_bounds = array<i64: 8, 128>}, {transform_indices = @transform_4, window_bounds = array<i64: 8, 128>}, {transform_indices = @transform_5, window_bounds = array<i64: 8, 128>}]} {
    %c0 = arith.constant 0 : index
    %c0_0 = arith.constant 0 : index
    %0 = vector.load %arg1[%c0, %c0_0] : memref<8x16xf32, #tpu.memory_space<vmem>>, vector<8x16xf32>
    %1 = arith.truncf %0 : vector<8x16xf32> to vector<8x16xbf16>
    %c0_1 = arith.constant 0 : index
    %c0_2 = arith.constant 0 : index
    %2 = vector.load %arg2[%c0_1, %c0_2] : memref<16x384xf32, #tpu.memory_space<vmem>>, vector<16x384xf32>
    %3 = arith.truncf %2 : vector<16x384xf32> to vector<16x384xbf16>
    %cst = arith.constant dense<0.000000e+00> : vector<8x384xf32>
    %4 = tpu.matmul %1, %3, %cst {dimension_numbers = #tpu.dot_dimension_numbers<[1], [0], [0], [1], [0, 0, 1, 1], [], []>} : vector<8x16xbf16>, vector<16x384xbf16>, vector<8x384xf32> -> vector<8x384xf32>
    %c0_3 = arith.constant 0 : index
    %c0_4 = arith.constant 0 : index
    %5 = vector.load %arg3[%c0_3, %c0_4] : memref<1x384xf32, #tpu.memory_space<vmem>>, vector<1x384xf32>
    %6 = vector.broadcast %5 : vector<1x384xf32> to vector<8x384xf32>
    %7 = arith.addf %4, %6 : vector<8x384xf32>
    %8 = arith.truncf %7 : vector<8x384xf32> to vector<8x384xbf16>
    %9 = vector.extract_strided_slice %8 {offsets = [0, 0], sizes = [8, 128], strides = [1, 1]} : vector<8x384xbf16> to vector<8x128xbf16>
    %c0_5 = arith.constant 0 : index
    %c0_6 = arith.constant 0 : index
    %10 = vector.load %arg4[%c0_5, %c0_6] : memref<8x128xbf16, #tpu.memory_space<vmem>>, vector<8x128xbf16>
    tpu.vector_store %arg4[%c0_5, %c0_6], %9 {strides = array<i32>} : memref<8x128xbf16, #tpu.memory_space<vmem>>, vector<8x128xbf16>,
    %11 = vector.extract_strided_slice %8 {offsets = [0, 128], sizes = [8, 128], strides = [1, 1]} : vector<8x384xbf16> to vector<8x128xbf16>
    %c0_7 = arith.constant 0 : index
    %c0_8 = arith.constant 0 : index
    %12 = vector.load %arg5[%c0_7, %c0_8] : memref<8x128xbf16, #tpu.memory_space<vmem>>, vector<8x128xbf16>
    tpu.vector_store %arg5[%c0_7, %c0_8], %11 {strides = array<i32>} : memref<8x128xbf16, #tpu.memory_space<vmem>>, vector<8x128xbf16>,
    %13 = vector.extract_strided_slice %8 {offsets = [0, 256], sizes = [8, 128], strides = [1, 1]} : vector<8x384xbf16> to vector<8x128xbf16>
    %c0_9 = arith.constant 0 : index
    %c0_10 = arith.constant 0 : index
    %14 = vector.load %arg6[%c0_9, %c0_10] : memref<8x128xbf16, #tpu.memory_space<vmem>>, vector<8x128xbf16>
    tpu.vector_store %arg6[%c0_9, %c0_10], %13 {strides = array<i32>} : memref<8x128xbf16, #tpu.memory_space<vmem>>, vector<8x128xbf16>,
    return
  }
  func.func @transform_0(%arg0: i32) -> (i32, i32) {
    %c0_i32 = arith.constant 0 : i32
    %c0_i32_0 = arith.constant 0 : i32
    return %arg0, %c0_i32 : i32, i32
  }
  func.func @transform_1(%arg0: i32) -> (i32, i32) {
    %c0_i32 = arith.constant 0 : i32
    %c0_i32_0 = arith.constant 0 : i32
    %c0_i32_1 = arith.constant 0 : i32
    return %c0_i32, %c0_i32_0 : i32, i32
  }
  func.func @transform_2(%arg0: i32) -> (i32, i32) {
    %c0_i32 = arith.constant 0 : i32
    %c0_i32_0 = arith.constant 0 : i32
    %c0_i32_1 = arith.constant 0 : i32
    return %c0_i32, %c0_i32_0 : i32, i32
  }
  func.func @transform_3(%arg0: i32) -> (i32, i32) {
    %c0_i32 = arith.constant 0 : i32
    %c0_i32_0 = arith.constant 0 : i32
    return %arg0, %c0_i32 : i32, i32
  }
  func.func @transform_4(%arg0: i32) -> (i32, i32) {
    %c0_i32 = arith.constant 0 : i32
    %c0_i32_0 = arith.constant 0 : i32
    return %arg0, %c0_i32 : i32, i32
  }
  func.func @transform_5(%arg0: i32) -> (i32, i32) {
    %c0_i32 = arith.constant 0 : i32
    %c0_i32_0 = arith.constant 0 : i32
    return %arg0, %c0_i32 : i32, i32
  }
}

</mosaic_0001>

<llo_original>
// kernel: tpu_custom_call.1
$region0: #{tpu_custom_call.1}
  #allocation0 [shape = 'u32[]', space=smem, size = 0x4, offset = 0x4, fixed_abs, tag = 'smem constant byte address 0x4 - core index']
  #allocation1 [shape = 'u32[144,128]{1,0:T(1,128)}', space=vmem, size = 0x12000, scoped, tag = 'internal scratch']
  %s0 = inlined_call_operand.hbm [shape: f32[8,16], index: 0, kind: input, shape index: {}]
  %s1 = inlined_call_operand.hbm [shape: f32[16,384], index: 1, kind: input, shape index: {}]
  %s2 = inlined_call_operand.vmem [shape: f32[1,384], index: 2, kind: input, shape index: {}]
  %s3 = inlined_call_operand.hbm [shape: bf16[8,128], index: 3, kind: output, shape index: {0}]
  %s4 = inlined_call_operand.hbm [shape: bf16[8,128], index: 4, kind: output, shape index: {1}]
  %s5 = inlined_call_operand.hbm [shape: bf16[8,128], index: 5, kind: output, shape index: {2}]
  %6 = xla_tuple %s3, %s4, %s5
  %s7 = sld [smem:[#allocation0]]
  $region46: #{tpu_custom_call.1} parent=0
    _
  %s9 = ssub.s32 1, %s7
  %s10 = scalar_select 0, %s9, %s7
  $region1: #{tpu_custom_call.1} parent=0
    #allocation2 [shape = 'u8[4096]{0}', space=vmem, size = 0x1000, scoped, tag = 'input window, operand 0, single buffered']
    #allocation3 [shape = 's32[1]{0}', space=sflag, size = 0x4, scoped, tag = 'scoped memory for tpu_custom_call.1']
    #allocation4 [shape = 's32[1]{0}', space=sflag, size = 0x4, scoped, tag = 'scoped memory for tpu_custom_call.1']
    #allocation5 [shape = 'u8[24576]{0}', space=vmem, size = 0x6000, scoped, tag = 'input window, operand 1, single buffered']
    #allocation6 [shape = 's32[1]{0}', space=sflag, size = 0x4, scoped, tag = 'scoped memory for tpu_custom_call.1']
    #allocation7 [shape = 'u8[2048]{0}', space=vmem, size = 0x800, scoped, tag = 'output window, operand 0, single buffered']
    #allocation8 [shape = 'u8[2048]{0}', space=vmem, size = 0x800, scoped, tag = 'output window, operand 1, single buffered']
    #allocation9 [shape = 's32[1]{0}', space=sflag, size = 0x4, scoped, tag = 'scoped memory for tpu_custom_call.1']
    #allocation10 [shape = 'u8[2048]{0}', space=vmem, size = 0x800, scoped, tag = 'output window, operand 2, single buffered']
    %11 = vsyncpa [#allocation3], 0
    %12 = vsyncpa [#allocation6], 0
    %13 = vsyncpa [#allocation4], 0
    %14 = vsyncpa [#allocation9], 0
    // Predicated region
    $region2: #{tpu_custom_call.1} parent=1 // pred_check
      _
    $region3: #{tpu_custom_call.1} parent=1 // pred_check_branch
      %16 = sbr.rel (0) target = $region5
    $region4: #{tpu_custom_call.1} parent=1 // pred_region
      %s18 = ssub.s32 128, 128
      %19 = vsyncadd [#allocation3], %s18
      %s21 = sshll.u32 [#allocation2], 4
      %s22 = int_to_ptr.vmem [resolvable:$true] %s21
      %24 = dma.hbm_to_vmem [thread:$0]  %s0, 128, %s22, [#allocation3]
    $region5: #{tpu_custom_call.1} parent=1 // pred_fallthru
      _
    // Predicated region
    $region6: #{tpu_custom_call.1} parent=1 // pred_check
      _
    $region7: #{tpu_custom_call.1} parent=1 // pred_check_branch
      %26 = sbr.rel (0) target = $region9
    $region8: #{tpu_custom_call.1} parent=1 // pred_region
      %s28 = ssub.s32 768, 768
      %29 = vsyncadd [#allocation6], %s28
      %s30 = sshll.u32 [#allocation5], 4
      %s31 = int_to_ptr.vmem [resolvable:$true] %s30
      %36 = dma.hbm_to_vmem [thread:$0]  %s1, 768, %s31, [#allocation6], 384, 384, 24
    $region9: #{tpu_custom_call.1} parent=1 // pred_fallthru
      _
    // Predicated region
    $region10: #{tpu_custom_call.1} parent=1 // pred_check
      _
    $region11: #{tpu_custom_call.1} parent=1 // pred_check_branch
      %38 = sbr.rel (0) target = $region13
    $region12: #{tpu_custom_call.1} parent=1 // pred_region
      _
    $region13: #{tpu_custom_call.1} parent=1 // pred_fallthru
      _
    // Predicated region
    $region14: #{tpu_custom_call.1} parent=1 // pred_check
      _
    $region15: #{tpu_custom_call.1} parent=1 // pred_check_branch
      %40 = sbr.rel (0) target = $region17
    $region16: #{tpu_custom_call.1} parent=1 // pred_region
      %41 = dma.done [#allocation3], 128
    $region17: #{tpu_custom_call.1} parent=1 // pred_fallthru
      _
    // Predicated region
    $region18: #{tpu_custom_call.1} parent=1 // pred_check
      _
    $region19: #{tpu_custom_call.1} parent=1 // pred_check_branch
      %43 = sbr.rel (0) target = $region21
    $region20: #{tpu_custom_call.1} parent=1 // pred_region
      %44 = dma.done [#allocation6], 768
    $region21: #{tpu_custom_call.1} parent=1 // pred_fallthru
      _
    %v46 = vld [vmem:[#allocation2] sm:$0xff]
    %v47 = vpack.c.bf16 %v46, %v46
    %v48 = vld [vmem:[#allocation5] sm:$0xff]
    %v49 = vld [vmem:[#allocation5 + $0x8] sm:$0xff]
    %v50 = vld [vmem:[#allocation5 + $0x10] sm:$0xff]
    %v51 = vld [vmem:[#allocation5 + $0x18] sm:$0xff]
    %v52 = vld [vmem:[#allocation5 + $0x20] sm:$0xff]
    %v53 = vld [vmem:[#allocation5 + $0x28] sm:$0xff]
    %v54 = vpack.c.bf16 %v51, %v48
    %v55 = vpack.c.bf16 %v52, %v49
    %v56 = vpack.c.bf16 %v53, %v50
    %v57 = vld [vmem:[%s2] sm:$0x7]
    %v59 = vlaneseq
    %v60 = vshrl.u32 %v59, 7
    %v61 = vsub.s32 0, %v60
    %v62 = vrot.slane %v57, %v61
    %v63 = vlaneseq
    %v64 = vshrl.u32 %v63, 7
    %v65 = vsub.s32 1, %v64
    %v66 = vrot.slane %v57, %v65
    %v67 = vlaneseq
    %v68 = vshrl.u32 %v67, 7
    %v69 = vsub.s32 2, %v68
    %v70 = vrot.slane %v57, %v69
    %vm74 = vcmask 130048
    %v76 = vsel %vm74, %v47, 0
    %78 = vmatprep.subr.bf16.mxu0 %v55
    %79 = vmatpush1.bf16.msra.mxu0 %v54
    %80 = vmatprep.subr.bf16.mxu0 0
    %81 = vmatpush1.bf16.msra.mxu0 0
    %82 = vmatprep.subr.bf16.mxu0 0
    %83 = vmatpush1.bf16.msra.mxu0 0
    %84 = vmatprep.subr.bf16.mxu0 0
    %85 = vmatpush1.bf16.msra.mxu0 0
    %86 = vmatprep.subr.bf16.mxu0 0
    %87 = vmatpush1.bf16.msra.mxu0 0
    %88 = vmatprep.subr.bf16.mxu0 0
    %89 = vmatpush1.bf16.msra.mxu0 0
    %90 = vmatprep.subr.bf16.mxu0 0
    %91 = vmatpush1.bf16.msra.mxu0 0
    %92 = vmatprep.subr.bf16.mxu0 0
    %93 = vmatpush1.bf16.msra.mxu0 0
    %94 = vmatprep.subr.bf16.mxu0 0
    %95 = vmatpush1.bf16.msra.mxu0 0
    %96 = vmatprep.subr.bf16.mxu0 0
    %97 = vmatpush1.bf16.msra.mxu0 0
    %98 = vmatprep.subr.bf16.mxu0 0
    %99 = vmatpush1.bf16.msra.mxu0 0
    %100 = vmatprep.subr.bf16.mxu0 0
    %101 = vmatpush1.bf16.msra.mxu0 0
    %102 = vmatprep.subr.bf16.mxu0 0
    %103 = vmatpush1.bf16.msra.mxu0 0
    %104 = vmatprep.subr.bf16.mxu0 0
    %105 = vmatpush1.bf16.msra.mxu0 0
    %106 = vmatprep.subr.bf16.mxu0 0
    %107 = vmatpush1.bf16.msra.mxu0 0
    %108 = vmatprep.subr.bf16.mxu0 0
    %109 = vmatpush1.bf16.msra.mxu0 0
    %110 = vmatprep.mubr.bf16.mxu0 0
    %111 = vmatmul.mubr.bf16.gmra.mrb[0].mxu0 %v76
    %v112 = vpop.f32.mrb[0].mxu0
    %v113 = vadd.f32 %v62, %v112
    %v114 = vpop.f32.mrb[0].mxu0
    %v115 = vadd.f32 %v66, %v114
    %v116 = vpop.f32.mrb[0].mxu0
    %v117 = vpop.f32.mrb[0].mxu0
    %118 = vdwg.mxu0
    %119 = vmatprep.subr.bf16.mxu0 0
    %120 = vmatpush1.bf16.msra.mxu0 %v56
    %121 = vmatprep.subr.bf16.mxu0 0
    %122 = vmatpush1.bf16.msra.mxu0 0
    %123 = vmatprep.subr.bf16.mxu0 0
    %124 = vmatpush1.bf16.msra.mxu0 0
    %125 = vmatprep.subr.bf16.mxu0 0
    %126 = vmatpush1.bf16.msra.mxu0 0
    %127 = vmatprep.subr.bf16.mxu0 0
    %128 = vmatpush1.bf16.msra.mxu0 0
    %129 = vmatprep.subr.bf16.mxu0 0
    %130 = vmatpush1.bf16.msra.mxu0 0
    %131 = vmatprep.subr.bf16.mxu0 0
    %132 = vmatpush1.bf16.msra.mxu0 0
    %133 = vmatprep.subr.bf16.mxu0 0
    %134 = vmatpush1.bf16.msra.mxu0 0
    %135 = vmatprep.subr.bf16.mxu0 0
    %136 = vmatpush1.bf16.msra.mxu0 0
    %137 = vmatprep.subr.bf16.mxu0 0
    %138 = vmatpush1.bf16.msra.mxu0 0
    %139 = vmatprep.subr.bf16.mxu0 0
    %140 = vmatpush1.bf16.msra.mxu0 0
    %141 = vmatprep.subr.bf16.mxu0 0
    %142 = vmatpush1.bf16.msra.mxu0 0
    %143 = vmatprep.subr.bf16.mxu0 0
    %144 = vmatpush1.bf16.msra.mxu0 0
    %145 = vmatprep.subr.bf16.mxu0 0
    %146 = vmatpush1.bf16.msra.mxu0 0
    %147 = vmatprep.subr.bf16.mxu0 0
    %148 = vmatpush1.bf16.msra.mxu0 0
    %149 = vmatprep.subr.bf16.mxu0 0
    %150 = vmatpush1.bf16.msra.mxu0 0
    %151 = vmatprep.mubr.bf16.mxu0 0
    %152 = vmatmul.mubr.bf16.gmra.mrb[0].mxu0 %v76
    %v153 = vpop.f32.mrb[0].mxu0
    %v154 = vadd.f32 %v70, %v153
    %v155 = vpop.f32.mrb[0].mxu0
    %v156 = vpop.f32.mrb[0].mxu0
    %v157 = vpop.f32.mrb[0].mxu0
    %158 = vdwg.mxu0
    %v159 = vpack.c.bf16 %v113, %v113
    %v160 = vpack.c.bf16 %v115, %v115
    %v161 = vpack.c.bf16 %v154, %v154
    %162 = vst [vmem:[#allocation7] sm:$0xf] %v159
    %163 = vst [vmem:[#allocation8] sm:$0xf] %v160
    %164 = vst [vmem:[#allocation10] sm:$0xf] %v161
    // Predicated region
    $region22: #{tpu_custom_call.1} parent=1 // pred_check
      _
    $region23: #{tpu_custom_call.1} parent=1 // pred_check_branch
      %166 = sbr.rel (0) target = $region25
    $region24: #{tpu_custom_call.1} parent=1 // pred_region
      %s168 = ssub.s32 64, 64
      %169 = vsyncadd [#allocation4], %s168
      %s171 = sshll.u32 [#allocation7], 4
      %s172 = int_to_ptr.vmem [resolvable:$true] %s171
      %174 = dma.vmem_to_hbm [thread:$0]  %s172, 64, %s3, [#allocation4]
    $region25: #{tpu_custom_call.1} parent=1 // pred_fallthru
      _
    // Predicated region
    $region26: #{tpu_custom_call.1} parent=1 // pred_check
      _
    $region27: #{tpu_custom_call.1} parent=1 // pred_check_branch
      %176 = sbr.rel (0) target = $region29
    $region28: #{tpu_custom_call.1} parent=1 // pred_region
      %s178 = ssub.s32 64, 64
      %179 = vsyncadd [#allocation9], %s178
      %s181 = sshll.u32 [#allocation8], 4
      %s182 = int_to_ptr.vmem [resolvable:$true] %s181
      %184 = dma.vmem_to_hbm [thread:$0]  %s182, 64, %s4, [#allocation9]
    $region29: #{tpu_custom_call.1} parent=1 // pred_fallthru
      _
    // Predicated region
    $region30: #{tpu_custom_call.1} parent=1 // pred_check
      _
    $region31: #{tpu_custom_call.1} parent=1 // pred_check_branch
      %186 = sbr.rel (0) target = $region33
    $region32: #{tpu_custom_call.1} parent=1 // pred_region
      %s188 = ssub.s32 64, 64
      %189 = vsyncadd [#allocation9], %s188
      %s191 = sshll.u32 [#allocation10], 4
      %s192 = int_to_ptr.vmem [resolvable:$true] %s191
      %194 = dma.vmem_to_hbm [thread:$0]  %s192, 64, %s5, [#allocation9]
    $region33: #{tpu_custom_call.1} parent=1 // pred_fallthru
      _
    // Predicated region
    $region34: #{tpu_custom_call.1} parent=1 // pred_check
      _
    $region35: #{tpu_custom_call.1} parent=1 // pred_check_branch
      %196 = sbr.rel (0) target = $region37
    $region36: #{tpu_custom_call.1} parent=1 // pred_region
      %197 = dma.done [#allocation4], 64
    $region37: #{tpu_custom_call.1} parent=1 // pred_fallthru
      _
    // Predicated region
    $region38: #{tpu_custom_call.1} parent=1 // pred_check
      _
    $region39: #{tpu_custom_call.1} parent=1 // pred_check_branch
      %199 = sbr.rel (0) target = $region41
    $region40: #{tpu_custom_call.1} parent=1 // pred_region
      %200 = dma.done [#allocation9], 64
    $region41: #{tpu_custom_call.1} parent=1 // pred_fallthru
      _
    // Predicated region
    $region42: #{tpu_custom_call.1} parent=1 // pred_check
      _
    $region43: #{tpu_custom_call.1} parent=1 // pred_check_branch
      %202 = sbr.rel (0) target = $region45
    $region44: #{tpu_custom_call.1} parent=1 // pred_region
      %203 = dma.done [#allocation9], 64
    $region45: #{tpu_custom_call.1} parent=1 // pred_fallthru
      _
    %204 = vsyncpa [#allocation3], 1
    %205 = vsyncpa [#allocation6], 1
    %206 = vsyncpa [#allocation4], 1
    %207 = vsyncpa [#allocation9], 1

</llo_original>
